<compile_context>
chip_gen: v5e
topology: v5e:2x2
jax: 0.10.0
libtpu: 0.0.40
codegen_flags: <defaults>
</compile_context>

<pallas_src>
import math
import jax
import jax.numpy as jnp
from jax import lax
from jax.experimental import pallas as pl
from jax.experimental.pallas import tpu as pltpu


def block_kernel(x_ref, g_ref, wqkv_ref, w1_ref, w2_ref, o_ref):
    bt, T, C = x_ref.shape                       # batch tile, seq, emb
    mm_dtype = wqkv_ref.dtype                    # bf16 MXU compute dtype

    # Work on a flat (bt*T, C) row-matrix; leading-dim reshapes are layout-free.
    x = x_ref[...].astype(jnp.float32).reshape(bt * T, C)
    g1 = g_ref[0, :]
    g2 = g_ref[1, :]

    def layer_norm(z, g):
        # Fused single-pass stats: var = E[z^2] - mu^2 (no second reduction
        # over the centered tensor).  weight-only, bias=None, eps=1e-5.
        mu = jnp.mean(z, axis=-1, keepdims=True)
        var = jnp.mean(z * z, axis=-1, keepdims=True) - mu * mu
        return (z - mu) * lax.rsqrt(var + 1e-5) * g

    # ---- LayerNorm 1 ----
    h1 = layer_norm(x, g1)

    # ---- Fused QKV projection: one (bt*T, C) @ (C, 3C) MXU pass.
    #      The C**-0.5 attention scale is pre-folded into the q columns. ----
    qkv = jnp.dot(h1.astype(mm_dtype), wqkv_ref[...],
                  preferred_element_type=jnp.float32)            # (bt*T, 3C)
    # bf16 operands for the attention matmuls (f32 accumulation on the MXU).
    q = qkv[:, 0 * C:1 * C].reshape(bt, T, C).astype(mm_dtype)
    k = qkv[:, 1 * C:2 * C].reshape(bt, T, C).astype(mm_dtype)
    v = qkv[:, 2 * C:3 * C].reshape(bt, T, C).astype(mm_dtype)

    # ---- Causal attention (batched over the batch tile) ----
    # Contract the last dims of q and k directly -> no explicit transpose.
    wei = jnp.einsum('btc,bsc->bts', q, k,
                     preferred_element_type=jnp.float32)          # (bt, T, T)
    row = lax.broadcasted_iota(jnp.int32, (T, T), 0)
    col = lax.broadcasted_iota(jnp.int32, (T, T), 1)
    wei = jnp.where((col <= row)[None], wei, -1e30)   # finite mask -> no NaNs
    wei = wei - jnp.max(wei, axis=-1, keepdims=True)
    p = jnp.exp(wei)
    p = p * pl.reciprocal(jnp.sum(p, axis=-1, keepdims=True), approx=True)
    attn = jnp.einsum('bts,bsc->btc', p.astype(mm_dtype), v,
                      preferred_element_type=jnp.float32)         # (bt, T, C)
    # TODO(synk): nn.Dropout is treated as identity (eval mode / p=0).

    x1 = x + attn.reshape(bt * T, C)             # first residual

    # ---- LayerNorm 2 ----
    h2 = layer_norm(x1, g2)

    # ---- FeedForward: fc1 -> SiLU -> c_proj ----
    u = jnp.dot(h2.astype(mm_dtype), w1_ref[...],
                preferred_element_type=jnp.float32)               # (bt*T, 4C)
    u = u * jax.nn.sigmoid(u)                    # SiLU in f32
    ff = jnp.dot(u.astype(mm_dtype), w2_ref[...],
                 preferred_element_type=jnp.float32)              # (bt*T, C)

    o_ref[...] = (x1 + ff).reshape(bt, T, C).astype(o_ref.dtype)  # residual 2


def _resident_spec(shape):
    """BlockSpec for a weight whose block index never changes across the grid.

    Single-buffer it when the installed Pallas supports pipeline_mode
    (double-buffering a constant block only doubles its VMEM footprint)."""
    index_map = lambda *_: (0,) * len(shape)
    try:
        return pl.BlockSpec(shape, index_map, pipeline_mode=pl.Buffered(1))
    except (TypeError, AttributeError):
        return pl.BlockSpec(shape, index_map)


def block_forward(x, g, wqkv_t, w1_t, w2_t, *, batch_tile=None):
    """x: (B, T, C); g: (2, C) stacked LN gains; wqkv_t: (C, 3C) with C**-0.5
    folded into the q-slice; w1_t: (C, 4C); w2_t: (4C, C). Weights bf16."""
    B, T, C = x.shape
    H = w1_t.shape[1]

    if batch_tile is None:
        # Aim for ~256 rows (batch_tile*T) per grid step: decent MXU M and
        # >=2 pipelined steps once B is large enough.  At tiny B this yields a
        # single grid step on one core -- deliberately NOT splitting the batch
        # across v7x's two TensorCores, which would duplicate the weight DMA
        # (this kernel is weight-DMA bound) for no wall-clock win.
        bt = max(1, 256 // max(T, 1))
        bt = min(bt, B)
        while B % bt != 0:
            bt -= 1
        batch_tile = bt
    assert B % batch_tile == 0
    grid = (B // batch_tile,)

    # Explicit VMEM budget (bounded even when C scales; v7x only has 64 MiB).
    mm_bytes = jnp.dtype(wqkv_t.dtype).itemsize
    weight_bytes = (wqkv_t.size + w1_t.size + w2_t.size) * mm_bytes \
        + g.size * jnp.dtype(g.dtype).itemsize
    io_bytes = 2 * batch_tile * T * C * jnp.dtype(x.dtype).itemsize
    interm_bytes = batch_tile * T * (3 * C + H + 2 * C) * 4 \
        + batch_tile * T * T * 4
    vmem_limit = int(min(64 << 20,
                         max(16 << 20,
                             2 * (weight_bytes + io_bytes) + 2 * interm_bytes)))

    # NOTE: at real model widths (large C) the QKV/FFN matmuls should get a
    # K-reduction grid axis with an f32 VMEM accumulator, and per-layer weight
    # DMA should be hidden via cross-call prefetch (P10) or multi-layer fusion.
    return pl.pallas_call(
        block_kernel,
        out_shape=jax.ShapeDtypeStruct((B, T, C), x.dtype),
        grid_spec=pltpu.PrefetchScalarGridSpec(
            num_scalar_prefetch=0,
            grid=grid,
            in_specs=[
                pl.BlockSpec((batch_tile, T, C), lambda b: (b, 0, 0)),  # x
                _resident_spec((2, C)),      # stacked LayerNorm gains [g1; g2]
                _resident_spec((C, 3 * C)),  # fused [Wq^T * C**-0.5 | Wk^T | Wv^T]
                _resident_spec((C, H)),      # fc1^T
                _resident_spec((H, C)),      # c_proj^T
            ],
            out_specs=pl.BlockSpec((batch_tile, T, C), lambda b: (b, 0, 0)),
        ),
        compiler_params=pltpu.CompilerParams(
            dimension_semantics=("parallel",),
            vmem_limit_bytes=vmem_limit),
    )(x, g, wqkv_t, w1_t, w2_t)


def reference_forward(x, g1, g2, wq_t, wk_t, wv_t, w1_t, w2_t):
    """Pure-JAX f32 reference mirroring the PyTorch forward (eval mode)."""
    def ln(z, g):
        mu = jnp.mean(z, axis=-1, keepdims=True)
        var = jnp.mean((z - mu) ** 2, axis=-1, keepdims=True)
        return (z - mu) / jnp.sqrt(var + 1e-5) * g

    B, T, C = x.shape
    h = ln(x, g1)
    q, k, v = h @ wq_t, h @ wk_t, h @ wv_t
    wei = jnp.einsum('btc,bsc->bts', q, k) * (C ** -0.5)
    mask = jnp.tril(jnp.ones((T, T), bool))
    wei = jnp.where(mask, wei, -jnp.inf)
    wei = jax.nn.softmax(wei, axis=-1)
    x = x + jnp.einsum('bts,bsc->btc', wei, v)
    h2 = ln(x, g2)
    u = h2 @ w1_t
    return x + (u * jax.nn.sigmoid(u)) @ w2_t


if __name__ == "__main__":
    # ModelArgs: emb_dim=128, n_heads=4, window_size=8, dropout=0.0
    B, T, C = 2, 8, 128          # C=128 -> lane-dense activations
    H = 4 * C

    key = jax.random.PRNGKey(0)
    ks = jax.random.split(key, 6)
    x = jax.random.normal(ks[0], (B, T, C), dtype=jnp.float32)

    # nn.Linear-style deterministic init (uniform +-1/sqrt(fan_in)), weights
    # stored pre-transposed as [in, out].
    def lin(k, fan_in, fan_out):
        bound = 1.0 / math.sqrt(fan_in)
        return jax.random.uniform(k, (fan_in, fan_out), jnp.float32, -bound, bound)

    wq_t = lin(ks[1], C, C)
    wk_t = lin(ks[2], C, C)
    wv_t = lin(ks[3], C, C)
    w1_t = lin(ks[4], C, H)
    w2_t = lin(ks[5], H, C)
    g1 = jnp.ones((C,), jnp.float32)   # LayerNorm weights (init = ones)
    g2 = jnp.ones((C,), jnp.float32)

    # One-time host-side weight prep: fold attention scale into Wq, fuse QKV,
    # stack LN gains, cast matmul weights to bf16 (native MXU dtype on every
    # TPU generation; all non-matmul math stays f32 inside the kernel).
    mm_dtype = jnp.bfloat16
    wqkv_t = jnp.concatenate([wq_t * (C ** -0.5), wk_t, wv_t], axis=1)
    g = jnp.stack([g1, g2], axis=0)

    out = block_forward(x, g,
                        wqkv_t.astype(mm_dtype),
                        w1_t.astype(mm_dtype),
                        w2_t.astype(mm_dtype))
    out = jax.block_until_ready(out)

    ref = reference_forward(x, g1, g2, wq_t, wk_t, wv_t, w1_t, w2_t)
    assert out.shape == (B, T, C)
    rel_err = float(jnp.linalg.norm(out - ref) / jnp.linalg.norm(ref))
    assert rel_err < 5e-2, f"mismatch vs reference: rel_err={rel_err}"

    print("KERNEL_OK")
</pallas_src>

<mosaic_0001>
module attributes {stable_mosaic.version = 11 : i64} {
  func.func @block_kernel(%arg0: i32, %arg1: memref<2x8x128xf32, #tpu.memory_space<vmem>>, %arg2: memref<2x128xf32, #tpu.memory_space<vmem>>, %arg3: memref<128x384xbf16, #tpu.memory_space<vmem>>, %arg4: memref<128x512xbf16, #tpu.memory_space<vmem>>, %arg5: memref<512x128xbf16, #tpu.memory_space<vmem>>, %arg6: memref<2x8x128xf32, #tpu.memory_space<vmem>>) attributes {dimension_semantics = [#tpu.dimension_semantics<parallel>], iteration_bounds = array<i64: 1>, scalar_prefetch = 0 : i64, scratch_operands = 0 : i64, tpu.core_type = #tpu.core_type<tc>, window_params = [{transform_indices = @transform_0, window_bounds = array<i64: 2, 8, 128>}, {pipeline_mode = #tpu.pipeline_mode<synchronous>, transform_indices = @transform_1, window_bounds = array<i64: 2, 128>}, {pipeline_mode = #tpu.pipeline_mode<synchronous>, transform_indices = @transform_2, window_bounds = array<i64: 128, 384>}, {pipeline_mode = #tpu.pipeline_mode<synchronous>, transform_indices = @transform_3, window_bounds = array<i64: 128, 512>}, {pipeline_mode = #tpu.pipeline_mode<synchronous>, transform_indices = @transform_4, window_bounds = array<i64: 512, 128>}, {transform_indices = @transform_5, window_bounds = array<i64: 2, 8, 128>}]} {
    %c0 = arith.constant 0 : index
    %c0_0 = arith.constant 0 : index
    %c0_1 = arith.constant 0 : index
    %0 = vector.load %arg1[%c0, %c0_0, %c0_1] : memref<2x8x128xf32, #tpu.memory_space<vmem>>, vector<2x8x128xf32>
    %1 = vector.shape_cast %0 : vector<2x8x128xf32> to vector<16x128xf32>
    %c0_2 = arith.constant 0 : index
    %c0_3 = arith.constant 0 : index
    %2 = vector.load %arg2[%c0_2, %c0_3] : memref<2x128xf32, #tpu.memory_space<vmem>>, vector<1x128xf32>
    %3 = vector.shape_cast %2 : vector<1x128xf32> to vector<128xf32>
    %c1 = arith.constant 1 : index
    %c0_4 = arith.constant 0 : index
    %4 = vector.load %arg2[%c1, %c0_4] : memref<2x128xf32, #tpu.memory_space<vmem>>, vector<1x128xf32>
    %5 = vector.shape_cast %4 : vector<1x128xf32> to vector<128xf32>
    %cst = arith.constant dense<0.000000e+00> : vector<16xf32>
    %6 = vector.multi_reduction <add>, %1, %cst [1] : vector<16x128xf32> to vector<16xf32>
    %7 = vector.shape_cast %6 : vector<16xf32> to vector<16x1xf32>
    %cst_5 = arith.constant 1.280000e+02 : f32
    %8 = vector.broadcast %cst_5 : f32 to vector<16x1xf32>
    %9 = arith.divf %7, %8 : vector<16x1xf32>
    %10 = arith.mulf %1, %1 : vector<16x128xf32>
    %cst_6 = arith.constant dense<0.000000e+00> : vector<16xf32>
    %11 = vector.multi_reduction <add>, %10, %cst_6 [1] : vector<16x128xf32> to vector<16xf32>
    %12 = vector.shape_cast %11 : vector<16xf32> to vector<16x1xf32>
    %cst_7 = arith.constant 1.280000e+02 : f32
    %13 = vector.broadcast %cst_7 : f32 to vector<16x1xf32>
    %14 = arith.divf %12, %13 : vector<16x1xf32>
    %15 = arith.mulf %9, %9 : vector<16x1xf32>
    %16 = arith.subf %14, %15 : vector<16x1xf32>
    %17 = vector.broadcast %9 : vector<16x1xf32> to vector<16x128xf32>
    %18 = arith.subf %1, %17 : vector<16x128xf32>
    %cst_8 = arith.constant 9.99999974E-6 : f32
    %19 = vector.broadcast %cst_8 : f32 to vector<16x1xf32>
    %20 = arith.addf %16, %19 : vector<16x1xf32>
    %21 = math.rsqrt %20 : vector<16x1xf32>
    %22 = vector.broadcast %21 : vector<16x1xf32> to vector<16x128xf32>
    %23 = arith.mulf %18, %22 : vector<16x128xf32>
    %24 = vector.shape_cast %3 : vector<128xf32> to vector<1x128xf32>
    %25 = vector.broadcast %24 : vector<1x128xf32> to vector<16x128xf32>
    %26 = arith.mulf %23, %25 : vector<16x128xf32>
    %27 = arith.truncf %26 : vector<16x128xf32> to vector<16x128xbf16>
    %c0_9 = arith.constant 0 : index
    %c0_10 = arith.constant 0 : index
    %28 = vector.load %arg3[%c0_9, %c0_10] : memref<128x384xbf16, #tpu.memory_space<vmem>>, vector<128x384xbf16>
    %cst_11 = arith.constant dense<0.000000e+00> : vector<16x384xf32>
    %29 = tpu.matmul %27, %28, %cst_11 {dimension_numbers = #tpu.dot_dimension_numbers<[1], [0], [0], [1], [0, 0, 1, 1], [], []>} : vector<16x128xbf16>, vector<128x384xbf16>, vector<16x384xf32> -> vector<16x384xf32>
    %30 = vector.extract_strided_slice %29 {offsets = [0, 0], sizes = [16, 128], strides = [1, 1]} : vector<16x384xf32> to vector<16x128xf32>
    %31 = vector.shape_cast %30 : vector<16x128xf32> to vector<2x8x128xf32>
    %32 = arith.truncf %31 : vector<2x8x128xf32> to vector<2x8x128xbf16>
    %33 = vector.extract_strided_slice %29 {offsets = [0, 128], sizes = [16, 128], strides = [1, 1]} : vector<16x384xf32> to vector<16x128xf32>
    %34 = vector.shape_cast %33 : vector<16x128xf32> to vector<2x8x128xf32>
    %35 = arith.truncf %34 : vector<2x8x128xf32> to vector<2x8x128xbf16>
    %36 = vector.extract_strided_slice %29 {offsets = [0, 256], sizes = [16, 128], strides = [1, 1]} : vector<16x384xf32> to vector<16x128xf32>
    %37 = vector.shape_cast %36 : vector<16x128xf32> to vector<2x8x128xf32>
    %38 = arith.truncf %37 : vector<2x8x128xf32> to vector<2x8x128xbf16>
    "tpu.trace_start"() <{level = 10 : i32, message = "btc,bsc->bts"}> : () -> ()
    %cst_12 = arith.constant dense<0.000000e+00> : vector<2x8x8xf32>
    %39 = tpu.matmul %32, %35, %cst_12 {dimension_numbers = #tpu.dot_dimension_numbers<[2], [2], [1], [1], [0, 0, 0, 1, 1, 1], [0], [0]>} : vector<2x8x128xbf16>, vector<2x8x128xbf16>, vector<2x8x8xf32> -> vector<2x8x8xf32>
    "tpu.trace_stop"() : () -> ()
    %40 = tpu.iota {dimensions = array<i32: 0>} : vector<8x8xi32>
    %41 = tpu.iota {dimensions = array<i32: 1>} : vector<8x8xi32>
    %42 = arith.cmpi sle, %41, %40 : vector<8x8xi32>
    %43 = vector.shape_cast %42 : vector<8x8xi1> to vector<1x8x8xi1>
    %cst_13 = arith.constant -1.000000e+30 : f32
    %44 = vector.shape_cast %43 : vector<1x8x8xi1> to vector<1x8x8xi1>
    %45 = vector.broadcast %44 : vector<1x8x8xi1> to vector<2x8x8xi1>
    %46 = vector.broadcast %cst_13 : f32 to vector<2x8x8xf32>
    %47 = arith.select %45, %39, %46 : vector<2x8x8xi1>, vector<2x8x8xf32>
    %cst_14 = arith.constant dense<0xFF800000> : vector<2x8xf32>
    %48 = vector.multi_reduction <maximumf>, %47, %cst_14 [2] : vector<2x8x8xf32> to vector<2x8xf32>
    %49 = vector.shape_cast %48 : vector<2x8xf32> to vector<2x8x1xf32>
    %50 = vector.broadcast %49 : vector<2x8x1xf32> to vector<2x8x8xf32>
    %51 = arith.subf %47, %50 : vector<2x8x8xf32>
    %52 = math.exp %51 : vector<2x8x8xf32>
    %cst_15 = arith.constant dense<0.000000e+00> : vector<2x8xf32>
    %53 = vector.multi_reduction <add>, %52, %cst_15 [2] : vector<2x8x8xf32> to vector<2x8xf32>
    %54 = vector.shape_cast %53 : vector<2x8xf32> to vector<2x8x1xf32>
    %55 = tpu.reciprocal %54 {approx = true} : vector<2x8x1xf32> -> vector<2x8x1xf32>
    %56 = vector.broadcast %55 : vector<2x8x1xf32> to vector<2x8x8xf32>
    %57 = arith.mulf %52, %56 : vector<2x8x8xf32>
    %58 = arith.truncf %57 : vector<2x8x8xf32> to vector<2x8x8xbf16>
    "tpu.trace_start"() <{level = 10 : i32, message = "bts,bsc->btc"}> : () -> ()
    %cst_16 = arith.constant dense<0.000000e+00> : vector<2x8x128xf32>
    %59 = tpu.matmul %58, %38, %cst_16 {dimension_numbers = #tpu.dot_dimension_numbers<[2], [1], [1], [2], [0, 0, 0, 1, 1, 2], [0], [0]>} : vector<2x8x8xbf16>, vector<2x8x128xbf16>, vector<2x8x128xf32> -> vector<2x8x128xf32>
    "tpu.trace_stop"() : () -> ()
    %60 = vector.shape_cast %59 : vector<2x8x128xf32> to vector<16x128xf32>
    %61 = arith.addf %1, %60 : vector<16x128xf32>
    %cst_17 = arith.constant dense<0.000000e+00> : vector<16xf32>
    %62 = vector.multi_reduction <add>, %61, %cst_17 [1] : vector<16x128xf32> to vector<16xf32>
    %63 = vector.shape_cast %62 : vector<16xf32> to vector<16x1xf32>
    %cst_18 = arith.constant 1.280000e+02 : f32
    %64 = vector.broadcast %cst_18 : f32 to vector<16x1xf32>
    %65 = arith.divf %63, %64 : vector<16x1xf32>
    %66 = arith.mulf %61, %61 : vector<16x128xf32>
    %cst_19 = arith.constant dense<0.000000e+00> : vector<16xf32>
    %67 = vector.multi_reduction <add>, %66, %cst_19 [1] : vector<16x128xf32> to vector<16xf32>
    %68 = vector.shape_cast %67 : vector<16xf32> to vector<16x1xf32>
    %cst_20 = arith.constant 1.280000e+02 : f32
    %69 = vector.broadcast %cst_20 : f32 to vector<16x1xf32>
    %70 = arith.divf %68, %69 : vector<16x1xf32>
    %71 = arith.mulf %65, %65 : vector<16x1xf32>
    %72 = arith.subf %70, %71 : vector<16x1xf32>
    %73 = vector.broadcast %65 : vector<16x1xf32> to vector<16x128xf32>
    %74 = arith.subf %61, %73 : vector<16x128xf32>
    %cst_21 = arith.constant 9.99999974E-6 : f32
    %75 = vector.broadcast %cst_21 : f32 to vector<16x1xf32>
    %76 = arith.addf %72, %75 : vector<16x1xf32>
    %77 = math.rsqrt %76 : vector<16x1xf32>
    %78 = vector.broadcast %77 : vector<16x1xf32> to vector<16x128xf32>
    %79 = arith.mulf %74, %78 : vector<16x128xf32>
    %80 = vector.shape_cast %5 : vector<128xf32> to vector<1x128xf32>
    %81 = vector.broadcast %80 : vector<1x128xf32> to vector<16x128xf32>
    %82 = arith.mulf %79, %81 : vector<16x128xf32>
    %83 = arith.truncf %82 : vector<16x128xf32> to vector<16x128xbf16>
    %c0_22 = arith.constant 0 : index
    %c0_23 = arith.constant 0 : index
    %84 = vector.load %arg4[%c0_22, %c0_23] : memref<128x512xbf16, #tpu.memory_space<vmem>>, vector<128x512xbf16>
    %cst_24 = arith.constant dense<0.000000e+00> : vector<16x512xf32>
    %85 = tpu.matmul %83, %84, %cst_24 {dimension_numbers = #tpu.dot_dimension_numbers<[1], [0], [0], [1], [0, 0, 1, 1], [], []>} : vector<16x128xbf16>, vector<128x512xbf16>, vector<16x512xf32> -> vector<16x512xf32>
    %86 = arith.negf %85 : vector<16x512xf32>
    %87 = math.exp %86 : vector<16x512xf32>
    %cst_25 = arith.constant 1.000000e+00 : f32
    %88 = vector.broadcast %cst_25 : f32 to vector<16x512xf32>
    %89 = arith.addf %88, %87 : vector<16x512xf32>
    %90 = arith.divf %88, %89 : vector<16x512xf32>
    %91 = arith.mulf %85, %90 : vector<16x512xf32>
    %92 = arith.truncf %91 : vector<16x512xf32> to vector<16x512xbf16>
    %c0_26 = arith.constant 0 : index
    %c0_27 = arith.constant 0 : index
    %93 = vector.load %arg5[%c0_26, %c0_27] : memref<512x128xbf16, #tpu.memory_space<vmem>>, vector<512x128xbf16>
    %cst_28 = arith.constant dense<0.000000e+00> : vector<16x128xf32>
    %94 = tpu.matmul %92, %93, %cst_28 {dimension_numbers = #tpu.dot_dimension_numbers<[1], [0], [0], [1], [0, 0, 1, 1], [], []>} : vector<16x512xbf16>, vector<512x128xbf16>, vector<16x128xf32> -> vector<16x128xf32>
    %95 = arith.addf %61, %94 : vector<16x128xf32>
    %96 = vector.shape_cast %95 : vector<16x128xf32> to vector<2x8x128xf32>
    %c0_29 = arith.constant 0 : index
    %c0_30 = arith.constant 0 : index
    %c0_31 = arith.constant 0 : index
    %97 = vector.load %arg6[%c0_29, %c0_30, %c0_31] : memref<2x8x128xf32, #tpu.memory_space<vmem>>, vector<2x8x128xf32>
    tpu.vector_store %arg6[%c0_29, %c0_30, %c0_31], %96 {strides = array<i32>} : memref<2x8x128xf32, #tpu.memory_space<vmem>>, vector<2x8x128xf32>,
    return
  }
  func.func @transform_0(%arg0: i32) -> (i32, i32, i32) {
    %c0_i32 = arith.constant 0 : i32
    %c0_i32_0 = arith.constant 0 : i32
    %c0_i32_1 = arith.constant 0 : i32
    return %arg0, %c0_i32, %c0_i32_0 : i32, i32, i32
  }
  func.func @transform_1(%arg0: i32) -> (i32, i32) {
    %c0_i32 = arith.constant 0 : i32
    %c0_i32_0 = arith.constant 0 : i32
    %c0_i32_1 = arith.constant 0 : i32
    return %c0_i32, %c0_i32_0 : i32, i32
  }
  func.func @transform_2(%arg0: i32) -> (i32, i32) {
    %c0_i32 = arith.constant 0 : i32
    %c0_i32_0 = arith.constant 0 : i32
    %c0_i32_1 = arith.constant 0 : i32
    return %c0_i32, %c0_i32_0 : i32, i32
  }
  func.func @transform_3(%arg0: i32) -> (i32, i32) {
    %c0_i32 = arith.constant 0 : i32
    %c0_i32_0 = arith.constant 0 : i32
    %c0_i32_1 = arith.constant 0 : i32
    return %c0_i32, %c0_i32_0 : i32, i32
  }
  func.func @transform_4(%arg0: i32) -> (i32, i32) {
    %c0_i32 = arith.constant 0 : i32
    %c0_i32_0 = arith.constant 0 : i32
    %c0_i32_1 = arith.constant 0 : i32
    return %c0_i32, %c0_i32_0 : i32, i32
  }
  func.func @transform_5(%arg0: i32) -> (i32, i32, i32) {
    %c0_i32 = arith.constant 0 : i32
    %c0_i32_0 = arith.constant 0 : i32
    %c0_i32_1 = arith.constant 0 : i32
    return %arg0, %c0_i32, %c0_i32_0 : i32, i32, i32
  }
}

</mosaic_0001>

<llo_original>
// kernel: tpu_custom_call.1
$region0: #{tpu_custom_call.1}
  #allocation0 [shape = 'u32[]', space=smem, size = 0x4, offset = 0x4, fixed_abs, tag = 'smem constant byte address 0x4 - core index']
  #allocation1 [shape = 'u32[72,128]{1,0:T(1,128)}', space=vmem, size = 0x9000, scoped, tag = 'internal scratch']
  %s0 = inlined_call_operand.hbm [shape: f32[2,8,128], index: 0, kind: input, shape index: {}]
  %s1 = inlined_call_operand.hbm [shape: f32[2,128], index: 1, kind: input, shape index: {}]
  %s2 = inlined_call_operand.hbm [shape: bf16[128,384], index: 2, kind: input, shape index: {}]
  %s3 = inlined_call_operand.hbm [shape: bf16[128,512], index: 3, kind: input, shape index: {}]
  %s4 = inlined_call_operand.hbm [shape: bf16[512,128], index: 4, kind: input, shape index: {}]
  %s5 = inlined_call_operand.hbm [shape: f32[2,8,128], index: 5, kind: output, shape index: {}]
  %s6 = sld [smem:[#allocation0]]
  $region50: #{tpu_custom_call.1} parent=0
    _
  %s8 = ssub.s32 1, %s6
  %s9 = scalar_select 0, %s8, %s6
  $region1: #{tpu_custom_call.1} parent=0
    #allocation2 [shape = 'u8[8192]{0}', space=vmem, size = 0x2000, scoped, tag = 'input window, operand 0, single buffered']
    #allocation3 [shape = 's32[1]{0}', space=sflag, size = 0x4, scoped, tag = 'scoped memory for tpu_custom_call.1']
    #allocation4 [shape = 's32[1]{0}', space=sflag, size = 0x4, scoped, tag = 'scoped memory for tpu_custom_call.1']
    #allocation5 [shape = 'u8[1024]{0}', space=vmem, size = 0x400, scoped, tag = 'input window, operand 1, single buffered']
    #allocation6 [shape = 's32[1]{0}', space=sflag, size = 0x4, scoped, tag = 'scoped memory for tpu_custom_call.1']
    #allocation7 [shape = 'u8[98304]{0}', space=vmem, size = 0x18000, scoped, tag = 'input window, operand 2, single buffered']
    #allocation8 [shape = 'u8[131072]{0}', space=vmem, size = 0x20000, scoped, tag = 'input window, operand 3, single buffered']
    #allocation9 [shape = 's32[1]{0}', space=sflag, size = 0x4, scoped, tag = 'scoped memory for tpu_custom_call.1']
    #allocation10 [shape = 'u8[131072]{0}', space=vmem, size = 0x20000, scoped, tag = 'input window, operand 4, single buffered']
    #allocation11 [shape = 'u8[8192]{0}', space=vmem, size = 0x2000, scoped, tag = 'output window, operand 0, single buffered']
    %10 = vsyncpa [#allocation3], 0
    %11 = vsyncpa [#allocation6], 0
    %12 = vsyncpa [#allocation9], 0
    %13 = vsyncpa [#allocation4], 0
    // Predicated region
    $region2: #{tpu_custom_call.1} parent=1 // pred_check
      _
    $region3: #{tpu_custom_call.1} parent=1 // pred_check_branch
      %15 = sbr.rel (0) target = $region5
    $region4: #{tpu_custom_call.1} parent=1 // pred_region
      %17 = vsyncadd [#allocation3], 0
      %s18 = sshll.u32 %s0, 4
      %s19 = int_to_ptr.hbm [resolvable:$true] %s18
      %s20 = sshll.u32 [#allocation2], 4
      %s21 = int_to_ptr.vmem [resolvable:$true] %s20
      %26 = dma.hbm_to_vmem [thread:$0]  %s19, 256, %s21, [#allocation3], 128, 128, 8
    $region5: #{tpu_custom_call.1} parent=1 // pred_fallthru
      _
    // Predicated region
    $region6: #{tpu_custom_call.1} parent=1 // pred_check
      _
    $region7: #{tpu_custom_call.1} parent=1 // pred_check_branch
      %28 = sbr.rel (0) target = $region9
    $region8: #{tpu_custom_call.1} parent=1 // pred_region
      %30 = vsyncadd [#allocation6], 0
      %s32 = sshll.u32 %s1, 4
      %s33 = int_to_ptr.hbm [resolvable:$true] %s32
      %s34 = sshll.u32 [#allocation5], 4
      %s35 = int_to_ptr.vmem [resolvable:$true] %s34
      %37 = dma.hbm_to_vmem [thread:$0]  %s33, 32, %s35, [#allocation6]
    $region9: #{tpu_custom_call.1} parent=1 // pred_fallthru
      _
    // Predicated region
    $region10: #{tpu_custom_call.1} parent=1 // pred_check
      _
    $region11: #{tpu_custom_call.1} parent=1 // pred_check_branch
      %39 = sbr.rel (0) target = $region13
    $region12: #{tpu_custom_call.1} parent=1 // pred_region
      %41 = vsyncadd [#allocation6], 0
      %s42 = sshll.u32 %s2, 4
      %s43 = int_to_ptr.hbm [resolvable:$true] %s42
      %s44 = sshll.u32 [#allocation7], 4
      %s45 = int_to_ptr.vmem [resolvable:$true] %s44
      %50 = dma.hbm_to_vmem [thread:$0]  %s43, 3072, %s45, [#allocation6], 192, 192, 12
    $region13: #{tpu_custom_call.1} parent=1 // pred_fallthru
      _
    // Predicated region
    $region14: #{tpu_custom_call.1} parent=1 // pred_check
      _
    $region15: #{tpu_custom_call.1} parent=1 // pred_check_branch
      %52 = sbr.rel (0) target = $region17
    $region16: #{tpu_custom_call.1} parent=1 // pred_region
      %54 = vsyncadd [#allocation9], 0
      %s55 = sshll.u32 %s3, 4
      %s56 = int_to_ptr.hbm [resolvable:$true] %s55
      %s57 = sshll.u32 [#allocation8], 4
      %s58 = int_to_ptr.vmem [resolvable:$true] %s57
      %63 = dma.hbm_to_vmem [thread:$0]  %s56, 4096, %s58, [#allocation9], 256, 256, 16
    $region17: #{tpu_custom_call.1} parent=1 // pred_fallthru
      _
    // Predicated region
    $region18: #{tpu_custom_call.1} parent=1 // pred_check
      _
    $region19: #{tpu_custom_call.1} parent=1 // pred_check_branch
      %65 = sbr.rel (0) target = $region21
    $region20: #{tpu_custom_call.1} parent=1 // pred_region
      %67 = vsyncadd [#allocation9], 0
      %s68 = sshll.u32 %s4, 4
      %s69 = int_to_ptr.hbm [resolvable:$true] %s68
      %s70 = sshll.u32 [#allocation10], 4
      %s71 = int_to_ptr.vmem [resolvable:$true] %s70
      %76 = dma.hbm_to_vmem [thread:$0]  %s69, 4096, %s71, [#allocation9], 64, 64, 4
    $region21: #{tpu_custom_call.1} parent=1 // pred_fallthru
      _
    // Predicated region
    $region22: #{tpu_custom_call.1} parent=1 // pred_check
      _
    $region23: #{tpu_custom_call.1} parent=1 // pred_check_branch
      %78 = sbr.rel (0) target = $region25
    $region24: #{tpu_custom_call.1} parent=1 // pred_region
      %80 = dma.done [#allocation3], 256
    $region25: #{tpu_custom_call.1} parent=1 // pred_fallthru
      _
    // Predicated region
    $region26: #{tpu_custom_call.1} parent=1 // pred_check
      _
    $region27: #{tpu_custom_call.1} parent=1 // pred_check_branch
      %82 = sbr.rel (0) target = $region29
    $region28: #{tpu_custom_call.1} parent=1 // pred_region
      %84 = dma.done [#allocation6], 32
    $region29: #{tpu_custom_call.1} parent=1 // pred_fallthru
      _
    // Predicated region
    $region30: #{tpu_custom_call.1} parent=1 // pred_check
      _
    $region31: #{tpu_custom_call.1} parent=1 // pred_check_branch
      %86 = sbr.rel (0) target = $region33
    $region32: #{tpu_custom_call.1} parent=1 // pred_region
      %88 = dma.done [#allocation6], 3072
    $region33: #{tpu_custom_call.1} parent=1 // pred_fallthru
      _
    // Predicated region
    $region34: #{tpu_custom_call.1} parent=1 // pred_check
      _
    $region35: #{tpu_custom_call.1} parent=1 // pred_check_branch
      %90 = sbr.rel (0) target = $region37
    $region36: #{tpu_custom_call.1} parent=1 // pred_region
      %92 = dma.done [#allocation9], 4096
    $region37: #{tpu_custom_call.1} parent=1 // pred_fallthru
      _
    // Predicated region
    $region38: #{tpu_custom_call.1} parent=1 // pred_check
      _
    $region39: #{tpu_custom_call.1} parent=1 // pred_check_branch
      %94 = sbr.rel (0) target = $region41
    $region40: #{tpu_custom_call.1} parent=1 // pred_region
      %96 = dma.done [#allocation9], 4096
    $region41: #{tpu_custom_call.1} parent=1 // pred_fallthru
      _
    %v98 = vld [vmem:[#allocation2] sm:$0xff]
    %v99 = vld [vmem:[#allocation2 + $0x8] sm:$0xff]
    %v100 = vld [vmem:[#allocation5] sm:$0x1]
    %v101 = vld [vmem:[#allocation5 + $0x1] sm:$0x1]
    %102 = vadd.xlane.f32.xlu0 %v98
    %v103 = vpop.xlane.xlu0 %102
    %104 = vadd.xlane.f32.xlu0 %v99
    %v105 = vpop.xlane.xlu0 %104
    %v106 = vrcp.pop 128.0
    %v107 = vmul.f32 128.0, %v106
    %v108 = vsub.f32 1.0, %v107
    %v109 = vmul.f32 %v106, %v108
    %v110 = vadd.f32 %v106, %v109
    %vm111 = vweird.f32 %v106
    %v112 = vsel %vm111, %v106, %v110
    %v113 = vmul.f32 %v103, %v112
    %v114 = vmul.f32 %v105, %v112
    %v115 = vmul.f32 %v98, %v98
    %v116 = vmul.f32 %v99, %v99
    %117 = vadd.xlane.f32.xlu0 %v115
    %v118 = vpop.xlane.xlu0 %117
    %119 = vadd.xlane.f32.xlu0 %v116
    %v120 = vpop.xlane.xlu0 %119
    %v121 = vmul.f32 %v118, %v112
    %v122 = vmul.f32 %v120, %v112
    %v123 = vmul.f32 %v113, %v113
    %v124 = vmul.f32 %v114, %v114
    %v125 = vsub.f32 %v121, %v123
    %v126 = vsub.f32 %v122, %v124
    %v127 = vsub.f32 %v98, %v113
    %v128 = vsub.f32 %v99, %v114
    %v129 = vadd.f32 %v125, 1e-05
    %v130 = vadd.f32 %v126, 1e-05
    %v131 = vrsqrt.pop %v129
    %v132 = vmul.f32 %v131, %v129
    %v133 = vmul.f32 %v132, %v131
    %v134 = vmul.f32 0.5, %v133
    %v135 = vsub.f32 1.5, %v134
    %v136 = vmul.f32 %v131, %v135
    %vm137 = vweird.f32 %v129
    %vm138 = vweird.f32 %v131
    %vm139 = vmor %vm137, %vm138
    %v140 = vsel %vm139, %v131, %v136
    %v141 = vrsqrt.pop %v130
    %v142 = vmul.f32 %v141, %v130
    %v143 = vmul.f32 %v142, %v141
    %v144 = vmul.f32 0.5, %v143
    %v145 = vsub.f32 1.5, %v144
    %v146 = vmul.f32 %v141, %v145
    %vm147 = vweird.f32 %v130
    %vm148 = vweird.f32 %v141
    %vm149 = vmor %vm147, %vm148
    %v150 = vsel %vm149, %v141, %v146
    %v151 = vmul.f32 %v127, %v140
    %v152 = vmul.f32 %v128, %v150
    %v153 = vperm.slane %v100, 0
    %v154 = vmul.f32 %v151, %v153
    %v155 = vmul.f32 %v152, %v153
    %v156 = vpack.c.bf16 %v155, %v154
    %v157 = vld [vmem:[#allocation7] sm:$0xff]
    %v158 = vld [vmem:[#allocation7 + $0x8] sm:$0xf]
    %v159 = vld [vmem:[#allocation7 + $0xc] sm:$0xff]
    %v160 = vld [vmem:[#allocation7 + $0x14] sm:$0xf]
    %v161 = vld [vmem:[#allocation7 + $0x18] sm:$0xff]
    %v162 = vld [vmem:[#allocation7 + $0x20] sm:$0xf]
    %v163 = vld [vmem:[#allocation7 + $0x24] sm:$0xff]
    %v164 = vld [vmem:[#allocation7 + $0x2c] sm:$0xf]
    %v165 = vld [vmem:[#allocation7 + $0x30] sm:$0xff]
    %v166 = vld [vmem:[#allocation7 + $0x38] sm:$0xf]
    %v167 = vld [vmem:[#allocation7 + $0x3c] sm:$0xff]
    %v168 = vld [vmem:[#allocation7 + $0x44] sm:$0xf]
    %v169 = vld [vmem:[#allocation7 + $0x48] sm:$0xff]
    %v170 = vld [vmem:[#allocation7 + $0x50] sm:$0xf]
    %v171 = vld [vmem:[#allocation7 + $0x54] sm:$0xff]
    %v172 = vld [vmem:[#allocation7 + $0x5c] sm:$0xf]
    %v173 = vld [vmem:[#allocation7 + $0x60] sm:$0xff]
    %v174 = vld [vmem:[#allocation7 + $0x68] sm:$0xf]
    %v175 = vld [vmem:[#allocation7 + $0x6c] sm:$0xff]
    %v176 = vld [vmem:[#allocation7 + $0x74] sm:$0xf]
    %v177 = vld [vmem:[#allocation7 + $0x78] sm:$0xff]
    %v178 = vld [vmem:[#allocation7 + $0x80] sm:$0xf]
    %v179 = vld [vmem:[#allocation7 + $0x84] sm:$0xff]
    %v180 = vld [vmem:[#allocation7 + $0x8c] sm:$0xf]
    %v181 = vld [vmem:[#allocation7 + $0x90] sm:$0xff]
    %v182 = vld [vmem:[#allocation7 + $0x98] sm:$0xf]
    %v183 = vld [vmem:[#allocation7 + $0x9c] sm:$0xff]
    %v184 = vld [vmem:[#allocation7 + $0xa4] sm:$0xf]
    %v185 = vld [vmem:[#allocation7 + $0xa8] sm:$0xff]
    %v186 = vld [vmem:[#allocation7 + $0xb0] sm:$0xf]
    %v187 = vld [vmem:[#allocation7 + $0xb4] sm:$0xff]
    %v188 = vld [vmem:[#allocation7 + $0xbc] sm:$0xf]
    %v221 = vunpack.c.l.b16 %v157
    %v222 = vunpack.c.h.b16 %v157
    %v223 = vunpack.c.l.b16 %v158
    %v224 = vunpack.c.l.b16 %v159
    %v225 = vunpack.c.h.b16 %v159
    %v226 = vunpack.c.l.b16 %v160
    %v227 = vunpack.c.l.b16 %v161
    %v228 = vunpack.c.h.b16 %v161
    %v229 = vunpack.c.l.b16 %v162
    %v230 = vunpack.c.l.b16 %v163
    %v231 = vunpack.c.h.b16 %v163
    %v232 = vunpack.c.l.b16 %v164
    %v233 = vunpack.c.l.b16 %v165
    %v234 = vunpack.c.h.b16 %v165
    %v235 = vunpack.c.l.b16 %v166
    %v236 = vunpack.c.l.b16 %v167
    %v237 = vunpack.c.h.b16 %v167
    %v238 = vunpack.c.l.b16 %v168
    %v239 = vunpack.c.l.b16 %v169
    %v240 = vunpack.c.h.b16 %v169
    %v241 = vunpack.c.l.b16 %v170
    %v242 = vunpack.c.l.b16 %v171
    %v243 = vunpack.c.h.b16 %v171
    %v244 = vunpack.c.l.b16 %v172
    %v245 = vunpack.c.l.b16 %v173
    %v246 = vunpack.c.h.b16 %v173
    %v247 = vunpack.c.l.b16 %v174
    %v248 = vunpack.c.l.b16 %v175
    %v249 = vunpack.c.h.b16 %v175
    %v250 = vunpack.c.l.b16 %v176
    %v251 = vunpack.c.l.b16 %v177
    %v252 = vunpack.c.h.b16 %v177
    %v253 = vunpack.c.l.b16 %v178
    %v254 = vunpack.c.l.b16 %v179
    %v255 = vunpack.c.h.b16 %v179
    %v256 = vunpack.c.l.b16 %v180
    %v257 = vunpack.c.l.b16 %v181
    %v258 = vunpack.c.h.b16 %v181
    %v259 = vunpack.c.l.b16 %v182
    %v260 = vunpack.c.l.b16 %v183
    %v261 = vunpack.c.h.b16 %v183
    %v262 = vunpack.c.l.b16 %v184
    %v263 = vunpack.c.l.b16 %v185
    %v264 = vunpack.c.h.b16 %v185
    %v265 = vunpack.c.l.b16 %v186
    %v266 = vunpack.c.l.b16 %v187
    %v267 = vunpack.c.h.b16 %v187
    %v268 = vunpack.c.l.b16 %v188
    %v269 = vpack.c.b16 %v224, %v221
    %v270 = vpack.c.b16 %v225, %v222
    %v271 = vpack.c.b16 %v226, %v223
    %v272 = vpack.c.b16 %v230, %v227
    %v273 = vpack.c.b16 %v231, %v228
    %v274 = vpack.c.b16 %v232, %v229
    %v275 = vpack.c.b16 %v236, %v233
    %v276 = vpack.c.b16 %v237, %v234
    %v277 = vpack.c.b16 %v238, %v235
    %v278 = vpack.c.b16 %v242, %v239
    %v279 = vpack.c.b16 %v243, %v240
    %v280 = vpack.c.b16 %v244, %v241
    %v281 = vpack.c.b16 %v248, %v245
    %v282 = vpack.c.b16 %v249, %v246
    %v283 = vpack.c.b16 %v250, %v247
    %v284 = vpack.c.b16 %v254, %v251
    %v285 = vpack.c.b16 %v255, %v252
    %v286 = vpack.c.b16 %v256, %v253
    %v287 = vpack.c.b16 %v260, %v257
    %v288 = vpack.c.b16 %v261, %v258
    %v289 = vpack.c.b16 %v262, %v259
    %v290 = vpack.c.b16 %v266, %v263
    %v291 = vpack.c.b16 %v267, %v264
    %v292 = vpack.c.b16 %v268, %v265
    %317 = vmatpush.bf16.msra.mxu0 %v290
    %318 = vmatpush.bf16.msra.mxu0 %v287
    %319 = vmatpush.bf16.msra.mxu0 %v284
    %320 = vmatpush.bf16.msra.mxu0 %v281
    %321 = vmatpush.bf16.msra.mxu0 %v278
    %322 = vmatpush.bf16.msra.mxu0 %v275
    %323 = vmatpush.bf16.msra.mxu0 %v272
    %324 = vmatpush.bf16.msra.mxu0 %v269
    %325 = vmatmul.bf16.gmra.mxu0 %v156
    %v326 = vpop.f32.mrf.mxu0
    %v327 = vadd.f32 0.0, %v326
    %v328 = vpop.f32.mrf.mxu0
    %v329 = vadd.f32 0.0, %v328
    %330 = vdwg.mxu0
    %331 = vmatpush.bf16.msra.mxu0 %v291
    %332 = vmatpush.bf16.msra.mxu0 %v288
    %333 = vmatpush.bf16.msra.mxu0 %v285
    %334 = vmatpush.bf16.msra.mxu0 %v282
    %335 = vmatpush.bf16.msra.mxu0 %v279
    %336 = vmatpush.bf16.msra.mxu0 %v276
    %337 = vmatpush.bf16.msra.mxu0 %v273
    %338 = vmatpush.bf16.msra.mxu0 %v270
    %339 = vmatmul.bf16.gmra.mxu0 %v156
    %v340 = vpop.f32.mrf.mxu0
    %v341 = vadd.f32 0.0, %v340
    %v342 = vpop.f32.mrf.mxu0
    %v343 = vadd.f32 0.0, %v342
    %344 = vdwg.mxu0
    %345 = vmatpush.bf16.msra.mxu0 %v292
    %346 = vmatpush.bf16.msra.mxu0 %v289
    %347 = vmatpush.bf16.msra.mxu0 %v286
    %348 = vmatpush.bf16.msra.mxu0 %v283
    %349 = vmatpush.bf16.msra.mxu0 %v280
    %350 = vmatpush.bf16.msra.mxu0 %v277
    %351 = vmatpush.bf16.msra.mxu0 %v274
    %352 = vmatpush.bf16.msra.mxu0 %v271
    %353 = vmatmul.bf16.gmra.mxu0 %v156
    %v354 = vpop.f32.mrf.mxu0
    %v355 = vadd.f32 0.0, %v354
    %v356 = vpop.f32.mrf.mxu0
    %v357 = vadd.f32 0.0, %v356
    %358 = vdwg.mxu0
    %v359 = vpack.c.bf16 %v327, %v327
    %v360 = vpack.c.bf16 %v329, %v329
    %v361 = vpack.c.bf16 %v341, %v341
    %v362 = vpack.c.bf16 %v343, %v343
    %v363 = vpack.c.bf16 %v355, %v355
    %v364 = vpack.c.bf16 %v357, %v357
    %365 = vmatpush.bf16.xpose.msra.mxu0 0
    %366 = vmatpush.bf16.xpose.msra.mxu0 0
    %367 = vmatpush.bf16.xpose.msra.mxu0 0
    %368 = vmatpush.bf16.xpose.msra.mxu0 0
    %369 = vmatpush.bf16.xpose.msra.mxu0 0
    %370 = vmatpush.bf16.xpose.msra.mxu0 0
    %371 = vmatpush.bf16.xpose.msra.mxu0 0
    %372 = vmatpush.bf16.xpose.msra.mxu0 %v361
    %373 = vmatmul.bf16.gmra.mxu0 %v359
    %v374 = vpop.f32.mrf.mxu0
    %v375 = vadd.f32 0.0, %v374
    %v376 = vpop.f32.mrf.mxu0
    %377 = vdwg.mxu0
    %378 = vmatpush.bf16.xpose.msra.mxu0 0
    %379 = vmatpush.bf16.xpose.msra.mxu0 0
    %380 = vmatpush.bf16.xpose.msra.mxu0 0
    %381 = vmatpush.bf16.xpose.msra.mxu0 0
    %382 = vmatpush.bf16.xpose.msra.mxu0 0
    %383 = vmatpush.bf16.xpose.msra.mxu0 0
    %384 = vmatpush.bf16.xpose.msra.mxu0 0
    %385 = vmatpush.bf16.xpose.msra.mxu0 %v362
    %386 = vmatmul.bf16.gmra.mxu0 %v360
    %v387 = vpop.f32.mrf.mxu0
    %v388 = vadd.f32 0.0, %v387
    %v389 = vpop.f32.mrf.mxu0
    %390 = vdwg.mxu0
    %v391 = vlaneseq
    %v392 = vshrl.u32 %v391, 7
    %v393 = vlaneseq
    %v394 = vand.u32 %v393, 127
    %vm395 = vcmp.le.s32.totalorder %v394, %v392
    %v396 = vsel %vm395, 1, 0
    %vm397 = vcmp.eq.s32.totalorder %v396, 1
    %v398 = vsel %vm397, %v375, -1e+30
    %v399 = vsel %vm397, %v388, -1e+30
    %vm400 = vcmask 64512
    %v401 = vsel %vm400, %v398, -inf
    %402 = vmax.xlane.f32.xlu0 %v401
    %v403 = vpop.xlane.xlu0 %402
    %v404 = vsel %vm400, %v399, -inf
    %405 = vmax.xlane.f32.xlu0 %v404
    %v406 = vpop.xlane.xlu0 %405
    %v407 = vsub.f32 %v398, %v403
    %v408 = vsub.f32 %v399, %v406
    %v409 = vmul.f32 %v407, 1.442695
    %v410 = vpow.pop %v409
    %v411 = vmul.f32 %v408, 1.442695
    %v412 = vpow.pop %v411
    %v413 = vsel %vm400, %v410, 0.0
    %414 = vadd.xlane.f32.xlu0 %v413
    %v415 = vpop.xlane.xlu0 %414
    %v416 = vsel %vm400, %v412, 0.0
    %417 = vadd.xlane.f32.xlu0 %v416
    %v418 = vpop.xlane.xlu0 %417
    %v419 = vrcp.pop %v415
    %v420 = vrcp.pop %v418
    %v421 = vmul.f32 %v410, %v419
    %v422 = vmul.f32 %v412, %v420
    %v423 = vpack.c.bf16 %v421, %v421
    %v424 = vpack.c.bf16 %v422, %v422
    %v426 = vsel %vm400, %v423, 0
    %vm428 = vcmask 1043456
    %v430 = vsel %vm428, %v363, 0
    %432 = vmatpush.bf16.msra.mxu0 0
    %433 = vmatpush.bf16.msra.mxu0 0
    %434 = vmatpush.bf16.msra.mxu0 0
    %435 = vmatpush.bf16.msra.mxu0 0
    %436 = vmatpush.bf16.msra.mxu0 0
    %437 = vmatpush.bf16.msra.mxu0 0
    %438 = vmatpush.bf16.msra.mxu0 0
    %439 = vmatpush.bf16.msra.mxu0 %v430
    %440 = vmatmul.bf16.gmra.mxu0 %v426
    %v441 = vpop.f32.mrf.mxu0
    %v442 = vadd.f32 0.0, %v441
    %v443 = vpop.f32.mrf.mxu0
    %444 = vdwg.mxu0
    %v446 = vsel %vm400, %v424, 0
    %v449 = vsel %vm428, %v364, 0
    %451 = vmatpush.bf16.msra.mxu0 0
    %452 = vmatpush.bf16.msra.mxu0 0
    %453 = vmatpush.bf16.msra.mxu0 0
    %454 = vmatpush.bf16.msra.mxu0 0
    %455 = vmatpush.bf16.msra.mxu0 0
    %456 = vmatpush.bf16.msra.mxu0 0
    %457 = vmatpush.bf16.msra.mxu0 0
    %458 = vmatpush.bf16.msra.mxu0 %v449
    %459 = vmatmul.bf16.gmra.mxu0 %v446
    %v460 = vpop.f32.mrf.mxu0
    %v461 = vadd.f32 0.0, %v460
    %v462 = vpop.f32.mrf.mxu0
    %463 = vdwg.mxu0
    %v464 = vadd.f32 %v98, %v442
    %v465 = vadd.f32 %v99, %v461
    %466 = vadd.xlane.f32.xlu0 %v464
    %v467 = vpop.xlane.xlu0 %466
    %468 = vadd.xlane.f32.xlu0 %v465
    %v469 = vpop.xlane.xlu0 %468
    %v470 = vmul.f32 %v467, %v112
    %v471 = vmul.f32 %v469, %v112
    %v472 = vmul.f32 %v464, %v464
    %v473 = vmul.f32 %v465, %v465
    %474 = vadd.xlane.f32.xlu0 %v472
    %v475 = vpop.xlane.xlu0 %474
    %476 = vadd.xlane.f32.xlu0 %v473
    %v477 = vpop.xlane.xlu0 %476
    %v478 = vmul.f32 %v475, %v112
    %v479 = vmul.f32 %v477, %v112
    %v480 = vmul.f32 %v470, %v470
    %v481 = vmul.f32 %v471, %v471
    %v482 = vsub.f32 %v478, %v480
    %v483 = vsub.f32 %v479, %v481
    %v484 = vsub.f32 %v464, %v470
    %v485 = vsub.f32 %v465, %v471
    %v486 = vadd.f32 %v482, 1e-05
    %v487 = vadd.f32 %v483, 1e-05
    %v488 = vrsqrt.pop %v486
    %v489 = vmul.f32 %v488, %v486
    %v490 = vmul.f32 %v489, %v488
    %v491 = vmul.f32 0.5, %v490
    %v492 = vsub.f32 1.5, %v491
    %v493 = vmul.f32 %v488, %v492
    %vm494 = vweird.f32 %v486
    %vm495 = vweird.f32 %v488
    %vm496 = vmor %vm494, %vm495
    %v497 = vsel %vm496, %v488, %v493
    %v498 = vrsqrt.pop %v487
    %v499 = vmul.f32 %v498, %v487
    %v500 = vmul.f32 %v499, %v498
    %v501 = vmul.f32 0.5, %v500
    %v502 = vsub.f32 1.5, %v501
    %v503 = vmul.f32 %v498, %v502
    %vm504 = vweird.f32 %v487
    %vm505 = vweird.f32 %v498
    %vm506 = vmor %vm504, %vm505
    %v507 = vsel %vm506, %v498, %v503
    %v508 = vmul.f32 %v484, %v497
    %v509 = vmul.f32 %v485, %v507
    %v510 = vperm.slane %v101, 0
    %v511 = vmul.f32 %v508, %v510
    %v512 = vmul.f32 %v509, %v510
    %v513 = vpack.c.bf16 %v512, %v511
    %v514 = vld [vmem:[#allocation8] sm:$0xff]
    %v515 = vld [vmem:[#allocation8 + $0x8] sm:$0xff]
    %v516 = vld [vmem:[#allocation8 + $0x10] sm:$0xff]
    %v517 = vld [vmem:[#allocation8 + $0x18] sm:$0xff]
    %v518 = vld [vmem:[#allocation8 + $0x20] sm:$0xff]
    %v519 = vld [vmem:[#allocation8 + $0x28] sm:$0xff]
    %v520 = vld [vmem:[#allocation8 + $0x30] sm:$0xff]
    %v521 = vld [vmem:[#allocation8 + $0x38] sm:$0xff]
    %v522 = vld [vmem:[#allocation8 + $0x40] sm:$0xff]
    %v523 = vld [vmem:[#allocation8 + $0x48] sm:$0xff]
    %v524 = vld [vmem:[#allocation8 + $0x50] sm:$0xff]
    %v525 = vld [vmem:[#allocation8 + $0x58] sm:$0xff]
    %v526 = vld [vmem:[#allocation8 + $0x60] sm:$0xff]
    %v527 = vld [vmem:[#allocation8 + $0x68] sm:$0xff]
    %v528 = vld [vmem:[#allocation8 + $0x70] sm:$0xff]
    %v529 = vld [vmem:[#allocation8 + $0x78] sm:$0xff]
    %v530 = vld [vmem:[#allocation8 + $0x80] sm:$0xff]
    %v531 = vld [vmem:[#allocation8 + $0x88] sm:$0xff]
    %v532 = vld [vmem:[#allocation8 + $0x90] sm:$0xff]
    %v533 = vld [vmem:[#allocation8 + $0x98] sm:$0xff]
    %v534 = vld [vmem:[#allocation8 + $0xa0] sm:$0xff]
    %v535 = vld [vmem:[#allocation8 + $0xa8] sm:$0xff]
    %v536 = vld [vmem:[#allocation8 + $0xb0] sm:$0xff]
    %v537 = vld [vmem:[#allocation8 + $0xb8] sm:$0xff]
    %v538 = vld [vmem:[#allocation8 + $0xc0] sm:$0xff]
    %v539 = vld [vmem:[#allocation8 + $0xc8] sm:$0xff]
    %v540 = vld [vmem:[#allocation8 + $0xd0] sm:$0xff]
    %v541 = vld [vmem:[#allocation8 + $0xd8] sm:$0xff]
    %v542 = vld [vmem:[#allocation8 + $0xe0] sm:$0xff]
    %v543 = vld [vmem:[#allocation8 + $0xe8] sm:$0xff]
    %v544 = vld [vmem:[#allocation8 + $0xf0] sm:$0xff]
    %v545 = vld [vmem:[#allocation8 + $0xf8] sm:$0xff]
    %v578 = vunpack.c.l.b16 %v514
    %v579 = vunpack.c.h.b16 %v514
    %v580 = vunpack.c.l.b16 %v515
    %v581 = vunpack.c.h.b16 %v515
    %v582 = vunpack.c.l.b16 %v516
    %v583 = vunpack.c.h.b16 %v516
    %v584 = vunpack.c.l.b16 %v517
    %v585 = vunpack.c.h.b16 %v517
    %v586 = vunpack.c.l.b16 %v518
    %v587 = vunpack.c.h.b16 %v518
    %v588 = vunpack.c.l.b16 %v519
    %v589 = vunpack.c.h.b16 %v519
    %v590 = vunpack.c.l.b16 %v520
    %v591 = vunpack.c.h.b16 %v520
    %v592 = vunpack.c.l.b16 %v521
    %v593 = vunpack.c.h.b16 %v521
    %v594 = vunpack.c.l.b16 %v522
    %v595 = vunpack.c.h.b16 %v522
    %v596 = vunpack.c.l.b16 %v523
    %v597 = vunpack.c.h.b16 %v523
    %v598 = vunpack.c.l.b16 %v524
    %v599 = vunpack.c.h.b16 %v524
    %v600 = vunpack.c.l.b16 %v525
    %v601 = vunpack.c.h.b16 %v525
    %v602 = vunpack.c.l.b16 %v526
    %v603 = vunpack.c.h.b16 %v526
    %v604 = vunpack.c.l.b16 %v527
    %v605 = vunpack.c.h.b16 %v527
    %v606 = vunpack.c.l.b16 %v528
    %v607 = vunpack.c.h.b16 %v528
    %v608 = vunpack.c.l.b16 %v529
    %v609 = vunpack.c.h.b16 %v529
    %v610 = vunpack.c.l.b16 %v530
    %v611 = vunpack.c.h.b16 %v530
    %v612 = vunpack.c.l.b16 %v531
    %v613 = vunpack.c.h.b16 %v531
    %v614 = vunpack.c.l.b16 %v532
    %v615 = vunpack.c.h.b16 %v532
    %v616 = vunpack.c.l.b16 %v533
    %v617 = vunpack.c.h.b16 %v533
    %v618 = vunpack.c.l.b16 %v534
    %v619 = vunpack.c.h.b16 %v534
    %v620 = vunpack.c.l.b16 %v535
    %v621 = vunpack.c.h.b16 %v535
    %v622 = vunpack.c.l.b16 %v536
    %v623 = vunpack.c.h.b16 %v536
    %v624 = vunpack.c.l.b16 %v537
    %v625 = vunpack.c.h.b16 %v537
    %v626 = vunpack.c.l.b16 %v538
    %v627 = vunpack.c.h.b16 %v538
    %v628 = vunpack.c.l.b16 %v539
    %v629 = vunpack.c.h.b16 %v539
    %v630 = vunpack.c.l.b16 %v540
    %v631 = vunpack.c.h.b16 %v540
    %v632 = vunpack.c.l.b16 %v541
    %v633 = vunpack.c.h.b16 %v541
    %v634 = vunpack.c.l.b16 %v542
    %v635 = vunpack.c.h.b16 %v542
    %v636 = vunpack.c.l.b16 %v543
    %v637 = vunpack.c.h.b16 %v543
    %v638 = vunpack.c.l.b16 %v544
    %v639 = vunpack.c.h.b16 %v544
    %v640 = vunpack.c.l.b16 %v545
    %v641 = vunpack.c.h.b16 %v545
    %v642 = vpack.c.b16 %v582, %v578
    %v643 = vpack.c.b16 %v583, %v579
    %v644 = vpack.c.b16 %v584, %v580
    %v645 = vpack.c.b16 %v585, %v581
    %v646 = vpack.c.b16 %v590, %v586
    %v647 = vpack.c.b16 %v591, %v587
    %v648 = vpack.c.b16 %v592, %v588
    %v649 = vpack.c.b16 %v593, %v589
    %v650 = vpack.c.b16 %v598, %v594
    %v651 = vpack.c.b16 %v599, %v595
    %v652 = vpack.c.b16 %v600, %v596
    %v653 = vpack.c.b16 %v601, %v597
    %v654 = vpack.c.b16 %v606, %v602
    %v655 = vpack.c.b16 %v607, %v603
    %v656 = vpack.c.b16 %v608, %v604
    %v657 = vpack.c.b16 %v609, %v605
    %v658 = vpack.c.b16 %v614, %v610
    %v659 = vpack.c.b16 %v615, %v611
    %v660 = vpack.c.b16 %v616, %v612
    %v661 = vpack.c.b16 %v617, %v613
    %v662 = vpack.c.b16 %v622, %v618
    %v663 = vpack.c.b16 %v623, %v619
    %v664 = vpack.c.b16 %v624, %v620
    %v665 = vpack.c.b16 %v625, %v621
    %v666 = vpack.c.b16 %v630, %v626
    %v667 = vpack.c.b16 %v631, %v627
    %v668 = vpack.c.b16 %v632, %v628
    %v669 = vpack.c.b16 %v633, %v629
    %v670 = vpack.c.b16 %v638, %v634
    %v671 = vpack.c.b16 %v639, %v635
    %v672 = vpack.c.b16 %v640, %v636
    %v673 = vpack.c.b16 %v641, %v637
    %706 = vmatpush.bf16.msra.mxu0 %v670
    %707 = vmatpush.bf16.msra.mxu0 %v666
    %708 = vmatpush.bf16.msra.mxu0 %v662
    %709 = vmatpush.bf16.msra.mxu0 %v658
    %710 = vmatpush.bf16.msra.mxu0 %v654
    %711 = vmatpush.bf16.msra.mxu0 %v650
    %712 = vmatpush.bf16.msra.mxu0 %v646
    %713 = vmatpush.bf16.msra.mxu0 %v642
    %714 = vmatmul.bf16.gmra.mxu0 %v513
    %v715 = vpop.f32.mrf.mxu0
    %v716 = vadd.f32 0.0, %v715
    %v717 = vpop.f32.mrf.mxu0
    %v718 = vadd.f32 0.0, %v717
    %719 = vdwg.mxu0
    %720 = vmatpush.bf16.msra.mxu0 %v671
    %721 = vmatpush.bf16.msra.mxu0 %v667
    %722 = vmatpush.bf16.msra.mxu0 %v663
    %723 = vmatpush.bf16.msra.mxu0 %v659
    %724 = vmatpush.bf16.msra.mxu0 %v655
    %725 = vmatpush.bf16.msra.mxu0 %v651
    %726 = vmatpush.bf16.msra.mxu0 %v647
    %727 = vmatpush.bf16.msra.mxu0 %v643
    %728 = vmatmul.bf16.gmra.mxu0 %v513
    %v729 = vpop.f32.mrf.mxu0
    %v730 = vadd.f32 0.0, %v729
    %v731 = vpop.f32.mrf.mxu0
    %v732 = vadd.f32 0.0, %v731
    %733 = vdwg.mxu0
    %734 = vmatpush.bf16.msra.mxu0 %v672
    %735 = vmatpush.bf16.msra.mxu0 %v668
    %736 = vmatpush.bf16.msra.mxu0 %v664
    %737 = vmatpush.bf16.msra.mxu0 %v660
    %738 = vmatpush.bf16.msra.mxu0 %v656
    %739 = vmatpush.bf16.msra.mxu0 %v652
    %740 = vmatpush.bf16.msra.mxu0 %v648
    %741 = vmatpush.bf16.msra.mxu0 %v644
    %742 = vmatmul.bf16.gmra.mxu0 %v513
    %v743 = vpop.f32.mrf.mxu0
    %v744 = vadd.f32 0.0, %v743
    %v745 = vpop.f32.mrf.mxu0
    %v746 = vadd.f32 0.0, %v745
    %747 = vdwg.mxu0
    %748 = vmatpush.bf16.msra.mxu0 %v673
    %749 = vmatpush.bf16.msra.mxu0 %v669
    %750 = vmatpush.bf16.msra.mxu0 %v665
    %751 = vmatpush.bf16.msra.mxu0 %v661
    %752 = vmatpush.bf16.msra.mxu0 %v657
    %753 = vmatpush.bf16.msra.mxu0 %v653
    %754 = vmatpush.bf16.msra.mxu0 %v649
    %755 = vmatpush.bf16.msra.mxu0 %v645
    %756 = vmatmul.bf16.gmra.mxu0 %v513
    %v757 = vpop.f32.mrf.mxu0
    %v758 = vadd.f32 0.0, %v757
    %v759 = vpop.f32.mrf.mxu0
    %v760 = vadd.f32 0.0, %v759
    %761 = vdwg.mxu0
    %v762 = vxor.u32 %v716, 2147483648
    %v763 = vxor.u32 %v730, 2147483648
    %v764 = vxor.u32 %v744, 2147483648
    %v765 = vxor.u32 %v758, 2147483648
    %v766 = vxor.u32 %v718, 2147483648
    %v767 = vxor.u32 %v732, 2147483648
    %v768 = vxor.u32 %v746, 2147483648
    %v769 = vxor.u32 %v760, 2147483648
    %v770 = vmul.f32 %v762, 1.442695
    %v771 = vpow.pop %v770
    %v772 = vmul.f32 %v763, 1.442695
    %v773 = vpow.pop %v772
    %v774 = vmul.f32 %v764, 1.442695
    %v775 = vpow.pop %v774
    %v776 = vmul.f32 %v765, 1.442695
    %v777 = vpow.pop %v776
    %v778 = vmul.f32 %v766, 1.442695
    %v779 = vpow.pop %v778
    %v780 = vmul.f32 %v767, 1.442695
    %v781 = vpow.pop %v780
    %v782 = vmul.f32 %v768, 1.442695
    %v783 = vpow.pop %v782
    %v784 = vmul.f32 %v769, 1.442695
    %v785 = vpow.pop %v784
    %v786 = vadd.f32 %v771, 1.0
    %v787 = vadd.f32 %v773, 1.0
    %v788 = vadd.f32 %v775, 1.0
    %v789 = vadd.f32 %v777, 1.0
    %v790 = vadd.f32 %v779, 1.0
    %v791 = vadd.f32 %v781, 1.0
    %v792 = vadd.f32 %v783, 1.0
    %v793 = vadd.f32 %v785, 1.0
    %v794 = vrcp.pop %v786
    %v795 = vmul.f32 %v786, %v794
    %v796 = vsub.f32 1.0, %v795
    %v797 = vmul.f32 %v794, %v796
    %v798 = vadd.f32 %v794, %v797
    %vm799 = vweird.f32 %v786
    %vm800 = vweird.f32 %v794
    %vm801 = vmor %vm799, %vm800
    %v802 = vsel %vm801, %v794, %v798
    %v803 = vand.u32 2147483647, %v786
    %vm804 = vcmp.eq.f32.partialorder %v803, 8.507059e+37
    %v805 = vand.u32 %v786, 2147483648
    %v806 = vor.u32 1.1754944e-38, %v805
    %v807 = vsel %vm804, %v806, %v802
    %v808 = vmul.f32 1.0, %v807
    %v809 = vrcp.pop %v787
    %v810 = vmul.f32 %v787, %v809
    %v811 = vsub.f32 1.0, %v810
    %v812 = vmul.f32 %v809, %v811
    %v813 = vadd.f32 %v809, %v812
    %vm814 = vweird.f32 %v787
    %vm815 = vweird.f32 %v809
    %vm816 = vmor %vm814, %vm815
    %v817 = vsel %vm816, %v809, %v813
    %v818 = vand.u32 2147483647, %v787
    %vm819 = vcmp.eq.f32.partialorder %v818, 8.507059e+37
    %v820 = vand.u32 %v787, 2147483648
    %v821 = vor.u32 1.1754944e-38, %v820
    %v822 = vsel %vm819, %v821, %v817
    %v823 = vmul.f32 1.0, %v822
    %v824 = vrcp.pop %v788
    %v825 = vmul.f32 %v788, %v824
    %v826 = vsub.f32 1.0, %v825
    %v827 = vmul.f32 %v824, %v826
    %v828 = vadd.f32 %v824, %v827
    %vm829 = vweird.f32 %v788
    %vm830 = vweird.f32 %v824
    %vm831 = vmor %vm829, %vm830
    %v832 = vsel %vm831, %v824, %v828
    %v833 = vand.u32 2147483647, %v788
    %vm834 = vcmp.eq.f32.partialorder %v833, 8.507059e+37
    %v835 = vand.u32 %v788, 2147483648
    %v836 = vor.u32 1.1754944e-38, %v835
    %v837 = vsel %vm834, %v836, %v832
    %v838 = vmul.f32 1.0, %v837
    %v839 = vrcp.pop %v789
    %v840 = vmul.f32 %v789, %v839
    %v841 = vsub.f32 1.0, %v840
    %v842 = vmul.f32 %v839, %v841
    %v843 = vadd.f32 %v839, %v842
    %vm844 = vweird.f32 %v789
    %vm845 = vweird.f32 %v839
    %vm846 = vmor %vm844, %vm845
    %v847 = vsel %vm846, %v839, %v843
    %v848 = vand.u32 2147483647, %v789
    %vm849 = vcmp.eq.f32.partialorder %v848, 8.507059e+37
    %v850 = vand.u32 %v789, 2147483648
    %v851 = vor.u32 1.1754944e-38, %v850
    %v852 = vsel %vm849, %v851, %v847
    %v853 = vmul.f32 1.0, %v852
    %v854 = vrcp.pop %v790
    %v855 = vmul.f32 %v790, %v854
    %v856 = vsub.f32 1.0, %v855
    %v857 = vmul.f32 %v854, %v856
    %v858 = vadd.f32 %v854, %v857
    %vm859 = vweird.f32 %v790
    %vm860 = vweird.f32 %v854
    %vm861 = vmor %vm859, %vm860
    %v862 = vsel %vm861, %v854, %v858
    %v863 = vand.u32 2147483647, %v790
    %vm864 = vcmp.eq.f32.partialorder %v863, 8.507059e+37
    %v865 = vand.u32 %v790, 2147483648
    %v866 = vor.u32 1.1754944e-38, %v865
    %v867 = vsel %vm864, %v866, %v862
    %v868 = vmul.f32 1.0, %v867
    %v869 = vrcp.pop %v791
    %v870 = vmul.f32 %v791, %v869
    %v871 = vsub.f32 1.0, %v870
    %v872 = vmul.f32 %v869, %v871
    %v873 = vadd.f32 %v869, %v872
    %vm874 = vweird.f32 %v791
    %vm875 = vweird.f32 %v869
    %vm876 = vmor %vm874, %vm875
    %v877 = vsel %vm876, %v869, %v873
    %v878 = vand.u32 2147483647, %v791
    %vm879 = vcmp.eq.f32.partialorder %v878, 8.507059e+37
    %v880 = vand.u32 %v791, 2147483648
    %v881 = vor.u32 1.1754944e-38, %v880
    %v882 = vsel %vm879, %v881, %v877
    %v883 = vmul.f32 1.0, %v882
    %v884 = vrcp.pop %v792
    %v885 = vmul.f32 %v792, %v884
    %v886 = vsub.f32 1.0, %v885
    %v887 = vmul.f32 %v884, %v886
    %v888 = vadd.f32 %v884, %v887
    %vm889 = vweird.f32 %v792
    %vm890 = vweird.f32 %v884
    %vm891 = vmor %vm889, %vm890
    %v892 = vsel %vm891, %v884, %v888
    %v893 = vand.u32 2147483647, %v792
    %vm894 = vcmp.eq.f32.partialorder %v893, 8.507059e+37
    %v895 = vand.u32 %v792, 2147483648
    %v896 = vor.u32 1.1754944e-38, %v895
    %v897 = vsel %vm894, %v896, %v892
    %v898 = vmul.f32 1.0, %v897
    %v899 = vrcp.pop %v793
    %v900 = vmul.f32 %v793, %v899
    %v901 = vsub.f32 1.0, %v900
    %v902 = vmul.f32 %v899, %v901
    %v903 = vadd.f32 %v899, %v902
    %vm904 = vweird.f32 %v793
    %vm905 = vweird.f32 %v899
    %vm906 = vmor %vm904, %vm905
    %v907 = vsel %vm906, %v899, %v903
    %v908 = vand.u32 2147483647, %v793
    %vm909 = vcmp.eq.f32.partialorder %v908, 8.507059e+37
    %v910 = vand.u32 %v793, 2147483648
    %v911 = vor.u32 1.1754944e-38, %v910
    %v912 = vsel %vm909, %v911, %v907
    %v913 = vmul.f32 1.0, %v912
    %v914 = vmul.f32 %v716, %v808
    %v915 = vmul.f32 %v730, %v823
    %v916 = vmul.f32 %v744, %v838
    %v917 = vmul.f32 %v758, %v853
    %v918 = vmul.f32 %v718, %v868
    %v919 = vmul.f32 %v732, %v883
    %v920 = vmul.f32 %v746, %v898
    %v921 = vmul.f32 %v760, %v913
    %v922 = vpack.c.bf16 %v918, %v914
    %v923 = vpack.c.bf16 %v919, %v915
    %v924 = vpack.c.bf16 %v920, %v916
    %v925 = vpack.c.bf16 %v921, %v917
    %v926 = vld [vmem:[#allocation10] sm:$0xf]
    %v927 = vld [vmem:[#allocation10 + $0x4] sm:$0xf]
    %v928 = vld [vmem:[#allocation10 + $0x8] sm:$0xf]
    %v929 = vld [vmem:[#allocation10 + $0xc] sm:$0xf]
    %v930 = vld [vmem:[#allocation10 + $0x10] sm:$0xf]
    %v931 = vld [vmem:[#allocation10 + $0x14] sm:$0xf]
    %v932 = vld [vmem:[#allocation10 + $0x18] sm:$0xf]
    %v933 = vld [vmem:[#allocation10 + $0x1c] sm:$0xf]
    %v934 = vld [vmem:[#allocation10 + $0x20] sm:$0xf]
    %v935 = vld [vmem:[#allocation10 + $0x24] sm:$0xf]
    %v936 = vld [vmem:[#allocation10 + $0x28] sm:$0xf]
    %v937 = vld [vmem:[#allocation10 + $0x2c] sm:$0xf]
    %v938 = vld [vmem:[#allocation10 + $0x30] sm:$0xf]
    %v939 = vld [vmem:[#allocation10 + $0x34] sm:$0xf]
    %v940 = vld [vmem:[#allocation10 + $0x38] sm:$0xf]
    %v941 = vld [vmem:[#allocation10 + $0x3c] sm:$0xf]
    %v942 = vld [vmem:[#allocation10 + $0x40] sm:$0xf]
    %v943 = vld [vmem:[#allocation10 + $0x44] sm:$0xf]
    %v944 = vld [vmem:[#allocation10 + $0x48] sm:$0xf]
    %v945 = vld [vmem:[#allocation10 + $0x4c] sm:$0xf]
    %v946 = vld [vmem:[#allocation10 + $0x50] sm:$0xf]
    %v947 = vld [vmem:[#allocation10 + $0x54] sm:$0xf]
    %v948 = vld [vmem:[#allocation10 + $0x58] sm:$0xf]
    %v949 = vld [vmem:[#allocation10 + $0x5c] sm:$0xf]
    %v950 = vld [vmem:[#allocation10 + $0x60] sm:$0xf]
    %v951 = vld [vmem:[#allocation10 + $0x64] sm:$0xf]
    %v952 = vld [vmem:[#allocation10 + $0x68] sm:$0xf]
    %v953 = vld [vmem:[#allocation10 + $0x6c] sm:$0xf]
    %v954 = vld [vmem:[#allocation10 + $0x70] sm:$0xf]
    %v955 = vld [vmem:[#allocation10 + $0x74] sm:$0xf]
    %v956 = vld [vmem:[#allocation10 + $0x78] sm:$0xf]
    %v957 = vld [vmem:[#allocation10 + $0x7c] sm:$0xf]
    %v958 = vld [vmem:[#allocation10 + $0x80] sm:$0xf]
    %v959 = vld [vmem:[#allocation10 + $0x84] sm:$0xf]
    %v960 = vld [vmem:[#allocation10 + $0x88] sm:$0xf]
    %v961 = vld [vmem:[#allocation10 + $0x8c] sm:$0xf]
    %v962 = vld [vmem:[#allocation10 + $0x90] sm:$0xf]
    %v963 = vld [vmem:[#allocation10 + $0x94] sm:$0xf]
    %v964 = vld [vmem:[#allocation10 + $0x98] sm:$0xf]
    %v965 = vld [vmem:[#allocation10 + $0x9c] sm:$0xf]
    %v966 = vld [vmem:[#allocation10 + $0xa0] sm:$0xf]
    %v967 = vld [vmem:[#allocation10 + $0xa4] sm:$0xf]
    %v968 = vld [vmem:[#allocation10 + $0xa8] sm:$0xf]
    %v969 = vld [vmem:[#allocation10 + $0xac] sm:$0xf]
    %v970 = vld [vmem:[#allocation10 + $0xb0] sm:$0xf]
    %v971 = vld [vmem:[#allocation10 + $0xb4] sm:$0xf]
    %v972 = vld [vmem:[#allocation10 + $0xb8] sm:$0xf]
    %v973 = vld [vmem:[#allocation10 + $0xbc] sm:$0xf]
    %v974 = vld [vmem:[#allocation10 + $0xc0] sm:$0xf]
    %v975 = vld [vmem:[#allocation10 + $0xc4] sm:$0xf]
    %v976 = vld [vmem:[#allocation10 + $0xc8] sm:$0xf]
    %v977 = vld [vmem:[#allocation10 + $0xcc] sm:$0xf]
    %v978 = vld [vmem:[#allocation10 + $0xd0] sm:$0xf]
    %v979 = vld [vmem:[#allocation10 + $0xd4] sm:$0xf]
    %v980 = vld [vmem:[#allocation10 + $0xd8] sm:$0xf]
    %v981 = vld [vmem:[#allocation10 + $0xdc] sm:$0xf]
    %v982 = vld [vmem:[#allocation10 + $0xe0] sm:$0xf]
    %v983 = vld [vmem:[#allocation10 + $0xe4] sm:$0xf]
    %v984 = vld [vmem:[#allocation10 + $0xe8] sm:$0xf]
    %v985 = vld [vmem:[#allocation10 + $0xec] sm:$0xf]
    %v986 = vld [vmem:[#allocation10 + $0xf0] sm:$0xf]
    %v987 = vld [vmem:[#allocation10 + $0xf4] sm:$0xf]
    %v988 = vld [vmem:[#allocation10 + $0xf8] sm:$0xf]
    %v989 = vld [vmem:[#allocation10 + $0xfc] sm:$0xf]
    %v1054 = vunpack.c.l.b16 %v926
    %v1055 = vunpack.c.l.b16 %v927
    %v1056 = vunpack.c.l.b16 %v928
    %v1057 = vunpack.c.l.b16 %v929
    %v1058 = vunpack.c.l.b16 %v930
    %v1059 = vunpack.c.l.b16 %v931
    %v1060 = vunpack.c.l.b16 %v932
    %v1061 = vunpack.c.l.b16 %v933
    %v1062 = vunpack.c.l.b16 %v934
    %v1063 = vunpack.c.l.b16 %v935
    %v1064 = vunpack.c.l.b16 %v936
    %v1065 = vunpack.c.l.b16 %v937
    %v1066 = vunpack.c.l.b16 %v938
    %v1067 = vunpack.c.l.b16 %v939
    %v1068 = vunpack.c.l.b16 %v940
    %v1069 = vunpack.c.l.b16 %v941
    %v1070 = vunpack.c.l.b16 %v942
    %v1071 = vunpack.c.l.b16 %v943
    %v1072 = vunpack.c.l.b16 %v944
    %v1073 = vunpack.c.l.b16 %v945
    %v1074 = vunpack.c.l.b16 %v946
    %v1075 = vunpack.c.l.b16 %v947
    %v1076 = vunpack.c.l.b16 %v948
    %v1077 = vunpack.c.l.b16 %v949
    %v1078 = vunpack.c.l.b16 %v950
    %v1079 = vunpack.c.l.b16 %v951
    %v1080 = vunpack.c.l.b16 %v952
    %v1081 = vunpack.c.l.b16 %v953
    %v1082 = vunpack.c.l.b16 %v954
    %v1083 = vunpack.c.l.b16 %v955
    %v1084 = vunpack.c.l.b16 %v956
    %v1085 = vunpack.c.l.b16 %v957
    %v1086 = vunpack.c.l.b16 %v958
    %v1087 = vunpack.c.l.b16 %v959
    %v1088 = vunpack.c.l.b16 %v960
    %v1089 = vunpack.c.l.b16 %v961
    %v1090 = vunpack.c.l.b16 %v962
    %v1091 = vunpack.c.l.b16 %v963
    %v1092 = vunpack.c.l.b16 %v964
    %v1093 = vunpack.c.l.b16 %v965
    %v1094 = vunpack.c.l.b16 %v966
    %v1095 = vunpack.c.l.b16 %v967
    %v1096 = vunpack.c.l.b16 %v968
    %v1097 = vunpack.c.l.b16 %v969
    %v1098 = vunpack.c.l.b16 %v970
    %v1099 = vunpack.c.l.b16 %v971
    %v1100 = vunpack.c.l.b16 %v972
    %v1101 = vunpack.c.l.b16 %v973
    %v1102 = vunpack.c.l.b16 %v974
    %v1103 = vunpack.c.l.b16 %v975
    %v1104 = vunpack.c.l.b16 %v976
    %v1105 = vunpack.c.l.b16 %v977
    %v1106 = vunpack.c.l.b16 %v978
    %v1107 = vunpack.c.l.b16 %v979
    %v1108 = vunpack.c.l.b16 %v980
    %v1109 = vunpack.c.l.b16 %v981
    %v1110 = vunpack.c.l.b16 %v982
    %v1111 = vunpack.c.l.b16 %v983
    %v1112 = vunpack.c.l.b16 %v984
    %v1113 = vunpack.c.l.b16 %v985
    %v1114 = vunpack.c.l.b16 %v986
    %v1115 = vunpack.c.l.b16 %v987
    %v1116 = vunpack.c.l.b16 %v988
    %v1117 = vunpack.c.l.b16 %v989
    %v1118 = vpack.c.b16 %v1055, %v1054
    %v1119 = vpack.c.b16 %v1057, %v1056
    %v1120 = vpack.c.b16 %v1059, %v1058
    %v1121 = vpack.c.b16 %v1061, %v1060
    %v1122 = vpack.c.b16 %v1063, %v1062
    %v1123 = vpack.c.b16 %v1065, %v1064
    %v1124 = vpack.c.b16 %v1067, %v1066
    %v1125 = vpack.c.b16 %v1069, %v1068
    %v1126 = vpack.c.b16 %v1071, %v1070
    %v1127 = vpack.c.b16 %v1073, %v1072
    %v1128 = vpack.c.b16 %v1075, %v1074
    %v1129 = vpack.c.b16 %v1077, %v1076
    %v1130 = vpack.c.b16 %v1079, %v1078
    %v1131 = vpack.c.b16 %v1081, %v1080
    %v1132 = vpack.c.b16 %v1083, %v1082
    %v1133 = vpack.c.b16 %v1085, %v1084
    %v1134 = vpack.c.b16 %v1087, %v1086
    %v1135 = vpack.c.b16 %v1089, %v1088
    %v1136 = vpack.c.b16 %v1091, %v1090
    %v1137 = vpack.c.b16 %v1093, %v1092
    %v1138 = vpack.c.b16 %v1095, %v1094
    %v1139 = vpack.c.b16 %v1097, %v1096
    %v1140 = vpack.c.b16 %v1099, %v1098
    %v1141 = vpack.c.b16 %v1101, %v1100
    %v1142 = vpack.c.b16 %v1103, %v1102
    %v1143 = vpack.c.b16 %v1105, %v1104
    %v1144 = vpack.c.b16 %v1107, %v1106
    %v1145 = vpack.c.b16 %v1109, %v1108
    %v1146 = vpack.c.b16 %v1111, %v1110
    %v1147 = vpack.c.b16 %v1113, %v1112
    %v1148 = vpack.c.b16 %v1115, %v1114
    %v1149 = vpack.c.b16 %v1117, %v1116
    %1182 = vmatpush.bf16.msra.mxu0 %v1125
    %1183 = vmatpush.bf16.msra.mxu0 %v1124
    %1184 = vmatpush.bf16.msra.mxu0 %v1123
    %1185 = vmatpush.bf16.msra.mxu0 %v1122
    %1186 = vmatpush.bf16.msra.mxu0 %v1121
    %1187 = vmatpush.bf16.msra.mxu0 %v1120
    %1188 = vmatpush.bf16.msra.mxu0 %v1119
    %1189 = vmatpush.bf16.msra.mxu0 %v1118
    %1190 = vmatmul.bf16.gmra.mxu0 %v922
    %v1191 = vpop.f32.mrf.mxu0
    %v1192 = vadd.f32 0.0, %v1191
    %v1193 = vpop.f32.mrf.mxu0
    %v1194 = vadd.f32 0.0, %v1193
    %1195 = vdwg.mxu0
    %1196 = vmatpush.bf16.msra.mxu0 %v1133
    %1197 = vmatpush.bf16.msra.mxu0 %v1132
    %1198 = vmatpush.bf16.msra.mxu0 %v1131
    %1199 = vmatpush.bf16.msra.mxu0 %v1130
    %1200 = vmatpush.bf16.msra.mxu0 %v1129
    %1201 = vmatpush.bf16.msra.mxu0 %v1128
    %1202 = vmatpush.bf16.msra.mxu0 %v1127
    %1203 = vmatpush.bf16.msra.mxu0 %v1126
    %1204 = vmatmul.bf16.gmra.mxu0 %v923
    %v1205 = vpop.f32.mrf.mxu0
    %v1206 = vadd.f32 %v1192, %v1205
    %v1207 = vpop.f32.mrf.mxu0
    %v1208 = vadd.f32 %v1194, %v1207
    %1209 = vdwg.mxu0
    %1210 = vmatpush.bf16.msra.mxu0 %v1141
    %1211 = vmatpush.bf16.msra.mxu0 %v1140
    %1212 = vmatpush.bf16.msra.mxu0 %v1139
    %1213 = vmatpush.bf16.msra.mxu0 %v1138
    %1214 = vmatpush.bf16.msra.mxu0 %v1137
    %1215 = vmatpush.bf16.msra.mxu0 %v1136
    %1216 = vmatpush.bf16.msra.mxu0 %v1135
    %1217 = vmatpush.bf16.msra.mxu0 %v1134
    %1218 = vmatmul.bf16.gmra.mxu0 %v924
    %v1219 = vpop.f32.mrf.mxu0
    %v1220 = vadd.f32 %v1206, %v1219
    %v1221 = vpop.f32.mrf.mxu0
    %v1222 = vadd.f32 %v1208, %v1221
    %1223 = vdwg.mxu0
    %1224 = vmatpush.bf16.msra.mxu0 %v1149
    %1225 = vmatpush.bf16.msra.mxu0 %v1148
    %1226 = vmatpush.bf16.msra.mxu0 %v1147
    %1227 = vmatpush.bf16.msra.mxu0 %v1146
    %1228 = vmatpush.bf16.msra.mxu0 %v1145
    %1229 = vmatpush.bf16.msra.mxu0 %v1144
    %1230 = vmatpush.bf16.msra.mxu0 %v1143
    %1231 = vmatpush.bf16.msra.mxu0 %v1142
    %1232 = vmatmul.bf16.gmra.mxu0 %v925
    %v1233 = vpop.f32.mrf.mxu0
    %v1234 = vadd.f32 %v1220, %v1233
    %v1235 = vpop.f32.mrf.mxu0
    %v1236 = vadd.f32 %v1222, %v1235
    %1237 = vdwg.mxu0
    %v1238 = vadd.f32 %v464, %v1234
    %v1239 = vadd.f32 %v465, %v1236
    %1240 = vst [vmem:[#allocation11] sm:$0xff] %v1238
    %1241 = vst [vmem:[#allocation11 + $0x8] sm:$0xff] %v1239
    // Predicated region
    $region42: #{tpu_custom_call.1} parent=1 // pred_check
      _
    $region43: #{tpu_custom_call.1} parent=1 // pred_check_branch
      %1243 = sbr.rel (0) target = $region45
    $region44: #{tpu_custom_call.1} parent=1 // pred_region
      %1245 = vsyncadd [#allocation4], 0
      %s1246 = sshll.u32 [#allocation11], 4
      %s1247 = int_to_ptr.vmem [resolvable:$true] %s1246
      %s1248 = sshll.u32 %s5, 4
      %s1249 = int_to_ptr.hbm [resolvable:$true] %s1248
      %1254 = dma.vmem_to_hbm [thread:$0]  %s1247, 256, %s1249, [#allocation4], 128, 128, 8
    $region45: #{tpu_custom_call.1} parent=1 // pred_fallthru
      _
    // Predicated region
    $region46: #{tpu_custom_call.1} parent=1 // pred_check
      _
    $region47: #{tpu_custom_call.1} parent=1 // pred_check_branch
      %1256 = sbr.rel (0) target = $region49
    $region48: #{tpu_custom_call.1} parent=1 // pred_region
      %1258 = dma.done [#allocation4], 256
    $region49: #{tpu_custom_call.1} parent=1 // pred_fallthru
      _
    %1259 = vsyncpa [#allocation3], 1
    %1260 = vsyncpa [#allocation6], 1
    %1261 = vsyncpa [#allocation9], 1
    %1262 = vsyncpa [#allocation4], 1

</llo_original>
